<compile_context>
chip_gen: v5e
topology: v5e:2x2
jax: 0.10.0
libtpu: 0.0.40
codegen_flags: <defaults>
</compile_context>

<pallas_src>
import functools

import jax
import jax.numpy as jnp
from jax.experimental import pallas as pl
from jax.experimental.pallas import tpu as pltpu

_LANES = 128  # lane width (last dim of every block)

_NATIVE_DTYPES = ("float32", "bfloat16", "float16")


def _round_up(x: int, m: int) -> int:
    return ((x + m - 1) // m) * m


def _sublane_multiple(dtype) -> int:
    # Min sublane tile per dtype: 8 for 4-byte, 16 for 2-byte, 32 for 1-byte.
    return {4: 8, 2: 16, 1: 32}.get(jnp.dtype(dtype).itemsize, 8)


def _chip_config():
    """Returns (num_splits, max_block_rows, axis0_semantics) for this TPU."""
    kind = ""
    try:
        kind = jax.devices()[0].device_kind.lower()
    except Exception:
        pass
    if ("v7" in kind) or ("7x" in kind):
        # v7x: 2 TensorCores/chip, ~3.2 TB/s HBM -> shard the fused block
        # stream across both cores (CORE_PARALLEL) and use bigger blocks so
        # the ~0.35us/step overhead stays hidden behind the DMA.
        return 2, 2048, pltpu.CORE_PARALLEL
    # v5e / v6e: single TensorCore -> no split axis; 1024x128 blocks already
    # sit near the HBM roofline (per-step DMA >> per-step overhead).
    return 1, 1024, pltpu.ARBITRARY


def _fused_l1_kernel(ai_ref, bi_ref, aw_ref, bw_ref,      # inputs
                     img_out_ref, wm_out_ref,             # (8,128) accumulator outputs
                     *, nblk_img, nblk_wm, rows_img, rows_wm,
                     brows_img, brows_wm, chunk):
    c = pl.program_id(0)              # split (TensorCore shard on v7x)
    j = pl.program_id(1)              # reduction step within the split
    g = c * chunk + j                 # global block index in the fused stream

    # The output tiles double as the per-split accumulators (resident across
    # the whole j axis; auto written back when the split finishes).
    @pl.when(j == 0)
    def _():
        img_out_ref[...] = jnp.zeros_like(img_out_ref)
        wm_out_ref[...] = jnp.zeros_like(wm_out_ref)

    def _fold(block_f32):
        # Tile-aligned (free) reshape + leading-axis tree-sum:
        # (brows,128) -> (8,128); the accumulator is touched once per step.
        return jnp.sum(block_f32.reshape(-1, 8, _LANES), axis=0)

    # --------------------------- image region ---------------------------
    img_ragged = (rows_img % brows_img) != 0           # static at trace time
    full_img = nblk_img - 1 if img_ragged else nblk_img

    if full_img > 0:
        @pl.when(g < full_img)                          # unmasked hot path
        def _():
            d = (ai_ref[...].astype(jnp.float32)
                 - bi_ref[...].astype(jnp.float32))
            img_out_ref[...] += _fold(jnp.abs(d))

    if img_ragged:
        @pl.when(g == nblk_img - 1)                     # masked ragged last block
        def _():
            row = ((nblk_img - 1) * brows_img
                   + jax.lax.broadcasted_iota(jnp.int32, (brows_img, _LANES), 0))
            d = (ai_ref[...].astype(jnp.float32)
                 - bi_ref[...].astype(jnp.float32))
            # NOTE: relies on select semantics: padded/OOB rows never reach the
            # accumulator even if |a-b| there is NaN/Inf.
            img_out_ref[...] += _fold(jnp.where(row < rows_img, jnp.abs(d), 0.0))

    # ------------------------- watermark region --------------------------
    wm_ragged = (rows_wm % brows_wm) != 0
    full_wm = nblk_wm - 1 if wm_ragged else nblk_wm

    if full_wm > 0:
        @pl.when(jnp.logical_and(g >= nblk_img, g < nblk_img + full_wm))
        def _():
            d = (aw_ref[...].astype(jnp.float32)
                 - bw_ref[...].astype(jnp.float32))
            wm_out_ref[...] += _fold(jnp.abs(d))

    if wm_ragged:
        @pl.when(g == nblk_img + nblk_wm - 1)
        def _():
            row = ((nblk_wm - 1) * brows_wm
                   + jax.lax.broadcasted_iota(jnp.int32, (brows_wm, _LANES), 0))
            d = (aw_ref[...].astype(jnp.float32)
                 - bw_ref[...].astype(jnp.float32))
            wm_out_ref[...] += _fold(jnp.where(row < rows_wm, jnp.abs(d), 0.0))


def _prep_pair(x, y, max_block_rows):
    """View a tensor pair as (rows, 128) in a kernel-friendly native dtype.

    No padded copies: only a free ravel/reshape for lane-aligned data; the
    (<128 element) lane-unaligned tail is summed in plain JAX.

    Returns (a2d, b2d, valid_rows, num_blocks, block_rows, tail_sum).
    """
    assert x.shape == y.shape, (x.shape, y.shape)
    if x.dtype.name not in _NATIVE_DTYPES:
        x = x.astype(jnp.float32)
    if y.dtype.name not in _NATIVE_DTYPES:
        y = y.astype(jnp.float32)

    xf = jnp.ravel(x)
    yf = jnp.ravel(y)
    n = xf.shape[0]
    rem = n % _LANES
    n_main = n - rem

    if rem:
        tail = jnp.sum(jnp.abs(xf[n_main:].astype(jnp.float32)
                               - yf[n_main:].astype(jnp.float32)))
    else:
        tail = jnp.float32(0.0)

    if n_main == 0:
        # Degenerate: tensor smaller than one lane row.  Feed a dummy zero
        # block (contributes exactly 0); all real elements went through `tail`.
        a2 = jnp.zeros((8, _LANES), jnp.float32)
        b2 = jnp.zeros((8, _LANES), jnp.float32)
        rows, sub = 8, 8
    else:
        rows = n_main // _LANES
        a2 = (xf[:n_main] if rem else xf).reshape(rows, _LANES)
        b2 = (yf[:n_main] if rem else yf).reshape(rows, _LANES)
        # Dtype-aware sublane rounding (8 for f32, 16 for bf16/f16).
        sub = max(_sublane_multiple(a2.dtype), _sublane_multiple(b2.dtype))

    block_rows = max(sub, min(max_block_rows, _round_up(rows, sub)))
    num_blocks = pl.cdiv(rows, block_rows)
    return a2, b2, rows, num_blocks, block_rows, tail


def fragile_recovery_loss(recovered_image, target_image,
                          recovered_watermark, target_watermark,
                          image_weight: float = 1.0,
                          watermark_weight: float = 1.0):
    """JAX/Pallas equivalent of FragileRecoveryLoss.forward (scalar f32)."""
    num_splits, max_rows, axis0_sem = _chip_config()

    ai, bi, rows_i, nblk_i, brows_i, tail_i = _prep_pair(
        recovered_image, target_image, max_rows)
    aw, bw, rows_w, nblk_w, brows_w, tail_w = _prep_pair(
        recovered_watermark, target_watermark, max_rows)

    total_blocks = nblk_i + nblk_w
    # Shard the fused block stream across the split axis (both TCs on v7x).
    chunk = pl.cdiv(total_blocks, num_splits)

    def img_index_map(c, j):
        g = c * chunk + j
        # Clamp outside the image region: same block stays resident, no re-DMA.
        return jnp.minimum(g, nblk_i - 1), 0

    def wm_index_map(c, j):
        g = c * chunk + j
        return jnp.minimum(jnp.maximum(g - nblk_i, 0), nblk_w - 1), 0

    out_index_map = lambda c, j: (c, 0)   # one resident accumulator tile/split

    kernel = functools.partial(
        _fused_l1_kernel,
        nblk_img=nblk_i, nblk_wm=nblk_w,
        rows_img=rows_i, rows_wm=rows_w,
        brows_img=brows_i, brows_wm=brows_w,
        chunk=chunk)

    # Advisory cost estimate: purely memory-bound streaming reduction.
    in_bytes = sum(int(t.size) * jnp.dtype(t.dtype).itemsize
                   for t in (ai, bi, aw, bw))
    out_bytes = 2 * num_splits * 8 * _LANES * 4
    cost = pl.CostEstimate(flops=3 * (int(ai.size) + int(aw.size)),
                           transcendentals=0,
                           bytes_accessed=in_bytes + out_bytes)

    img_part, wm_part = pl.pallas_call(
        kernel,
        out_shape=(
            jax.ShapeDtypeStruct((num_splits * 8, _LANES), jnp.float32),
            jax.ShapeDtypeStruct((num_splits * 8, _LANES), jnp.float32),
        ),
        grid_spec=pltpu.PrefetchScalarGridSpec(
            num_scalar_prefetch=0,
            grid=(num_splits, chunk),
            in_specs=[
                pl.BlockSpec((brows_i, _LANES), img_index_map),
                pl.BlockSpec((brows_i, _LANES), img_index_map),
                pl.BlockSpec((brows_w, _LANES), wm_index_map),
                pl.BlockSpec((brows_w, _LANES), wm_index_map),
            ],
            out_specs=[
                pl.BlockSpec((8, _LANES), out_index_map),
                pl.BlockSpec((8, _LANES), out_index_map),
            ],
        ),
        compiler_params=pltpu.CompilerParams(
            dimension_semantics=(axis0_sem, pltpu.ARBITRARY)),
        cost_estimate=cost,
    )(ai, bi, aw, bw)

    # Cheap scalar glue (final ~4 KiB reduce + mean + weighted sum) in plain JAX.
    # NOTE: zero-sized inputs give 0/0 = NaN, matching nn.L1Loss on empty input.
    image_loss = (jnp.sum(img_part) + tail_i) / jnp.float32(recovered_image.size)
    watermark_loss = (jnp.sum(wm_part) + tail_w) / jnp.float32(recovered_watermark.size)
    return (jnp.float32(image_weight) * image_loss
            + jnp.float32(watermark_weight) * watermark_loss)


if __name__ == "__main__":
    key = jax.random.PRNGKey(0)
    k1, k2, k3, k4 = jax.random.split(key, 4)

    def ref_loss(ri, ti, rw, tw, iw=1.0, ww=1.0):
        il = jnp.mean(jnp.abs(ri.astype(jnp.float32) - ti.astype(jnp.float32)))
        wl = jnp.mean(jnp.abs(rw.astype(jnp.float32) - tw.astype(jnp.float32)))
        return iw * il + ww * wl

    # Case 1: f32, small NCHW shapes (exercises the masked ragged-block path).
    ri = jax.random.normal(k1, (2, 3, 16, 16), dtype=jnp.float32)
    ti = jax.random.normal(k2, (2, 3, 16, 16), dtype=jnp.float32)
    rw = jax.random.normal(k3, (2, 1, 16, 16), dtype=jnp.float32)
    tw = jax.random.normal(k4, (2, 1, 16, 16), dtype=jnp.float32)
    out = jax.block_until_ready(fragile_recovery_loss(ri, ti, rw, tw))
    assert jnp.allclose(out, ref_loss(ri, ti, rw, tw), rtol=1e-5, atol=1e-6), out

    # Case 2: non-default weights (scalar glue).
    out_w = jax.block_until_ready(
        fragile_recovery_loss(ri, ti, rw, tw,
                              image_weight=0.25, watermark_weight=2.0))
    assert jnp.allclose(out_w, ref_loss(ri, ti, rw, tw, 0.25, 2.0),
                        rtol=1e-5, atol=1e-6), out_w

    # Case 3: bf16 inputs stream natively (16-row sublane rounding, unmasked
    # hot path, f32 accumulation inside the kernel).
    ri16 = jax.random.normal(k1, (2, 3, 32, 32), dtype=jnp.bfloat16)
    ti16 = jax.random.normal(k2, (2, 3, 32, 32), dtype=jnp.bfloat16)
    rw16 = jax.random.normal(k3, (2, 1, 32, 32), dtype=jnp.bfloat16)
    tw16 = jax.random.normal(k4, (2, 1, 32, 32), dtype=jnp.bfloat16)
    out16 = jax.block_until_ready(fragile_recovery_loss(ri16, ti16, rw16, tw16))
    assert jnp.allclose(out16, ref_loss(ri16, ti16, rw16, tw16),
                        rtol=1e-4, atol=1e-5), out16

    # Case 4: lane-unaligned numel (plain-JAX tail path).
    rw_odd = jax.random.normal(k3, (2, 1, 15, 15), dtype=jnp.float32)
    tw_odd = jax.random.normal(k4, (2, 1, 15, 15), dtype=jnp.float32)
    out_odd = jax.block_until_ready(fragile_recovery_loss(ri, ti, rw_odd, tw_odd))
    assert jnp.allclose(out_odd, ref_loss(ri, ti, rw_odd, tw_odd),
                        rtol=1e-5, atol=1e-6), out_odd

    print("KERNEL_OK")
</pallas_src>

<mosaic_0001>
module attributes {stable_mosaic.version = 11 : i64} {
  func.func @_fused_l1_kernel(%arg0: i32, %arg1: i32, %arg2: memref<16x128xf32, #tpu.memory_space<vmem>>, %arg3: memref<16x128xf32, #tpu.memory_space<vmem>>, %arg4: memref<8x128xf32, #tpu.memory_space<vmem>>, %arg5: memref<8x128xf32, #tpu.memory_space<vmem>>, %arg6: memref<8x128xf32, #tpu.memory_space<vmem>>, %arg7: memref<8x128xf32, #tpu.memory_space<vmem>>) attributes {dimension_semantics = [#tpu.dimension_semantics<arbitrary>, #tpu.dimension_semantics<arbitrary>], iteration_bounds = array<i64: 1, 2>, scalar_prefetch = 0 : i64, scratch_operands = 0 : i64, tpu.core_type = #tpu.core_type<tc>, window_params = [{transform_indices = @transform_0, window_bounds = array<i64: 16, 128>}, {transform_indices = @transform_1, window_bounds = array<i64: 16, 128>}, {transform_indices = @transform_2, window_bounds = array<i64: 8, 128>}, {transform_indices = @transform_3, window_bounds = array<i64: 8, 128>}, {transform_indices = @transform_4, window_bounds = array<i64: 8, 128>}, {transform_indices = @transform_5, window_bounds = array<i64: 8, 128>}]} {
    %c2_i32 = arith.constant 2 : i32
    %0 = arith.muli %arg0, %c2_i32 : i32
    %1 = arith.addi %0, %arg1 : i32
    %c0_i32 = arith.constant 0 : i32
    %2 = arith.cmpi eq, %arg1, %c0_i32 : i32
    %3 = arith.extui %2 : i1 to i32
    %c0_i32_0 = arith.constant 0 : i32
    %4 = arith.cmpi ne, %3, %c0_i32_0 : i32
    scf.if %4 {
      %cst = arith.constant 0.000000e+00 : f32
      %11 = vector.broadcast %cst : f32 to vector<8x128xf32>
      %c0 = arith.constant 0 : index
      %c0_4 = arith.constant 0 : index
      %12 = vector.load %arg6[%c0, %c0_4] : memref<8x128xf32, #tpu.memory_space<vmem>>, vector<8x128xf32>
      tpu.vector_store %arg6[%c0, %c0_4], %11 {strides = array<i32>} : memref<8x128xf32, #tpu.memory_space<vmem>>, vector<8x128xf32>,
      %cst_5 = arith.constant 0.000000e+00 : f32
      %13 = vector.broadcast %cst_5 : f32 to vector<8x128xf32>
      %c0_6 = arith.constant 0 : index
      %c0_7 = arith.constant 0 : index
      %14 = vector.load %arg7[%c0_6, %c0_7] : memref<8x128xf32, #tpu.memory_space<vmem>>, vector<8x128xf32>
      tpu.vector_store %arg7[%c0_6, %c0_7], %13 {strides = array<i32>} : memref<8x128xf32, #tpu.memory_space<vmem>>, vector<8x128xf32>,
    } else {
    }
    %c0_i32_1 = arith.constant 0 : i32
    %5 = arith.cmpi eq, %1, %c0_i32_1 : i32
    %6 = arith.extui %5 : i1 to i32
    %c0_i32_2 = arith.constant 0 : i32
    %7 = arith.cmpi ne, %6, %c0_i32_2 : i32
    scf.if %7 {
      %11 = tpu.iota {dimensions = array<i32: 0>} : vector<16x128xi32>
      %c0_i32_4 = arith.constant 0 : i32
      %12 = vector.broadcast %c0_i32_4 : i32 to vector<16x128xi32>
      %13 = arith.addi %12, %11 : vector<16x128xi32>
      %c0 = arith.constant 0 : index
      %c0_5 = arith.constant 0 : index
      %14 = vector.load %arg2[%c0, %c0_5] : memref<16x128xf32, #tpu.memory_space<vmem>>, vector<16x128xf32>
      %c0_6 = arith.constant 0 : index
      %c0_7 = arith.constant 0 : index
      %15 = vector.load %arg3[%c0_6, %c0_7] : memref<16x128xf32, #tpu.memory_space<vmem>>, vector<16x128xf32>
      %16 = arith.subf %14, %15 : vector<16x128xf32>
      %c0_8 = arith.constant 0 : index
      %c0_9 = arith.constant 0 : index
      %17 = vector.load %arg6[%c0_8, %c0_9] : memref<8x128xf32, #tpu.memory_space<vmem>>, vector<8x128xf32>
      %c12_i32 = arith.constant 12 : i32
      %18 = vector.broadcast %c12_i32 : i32 to vector<16x128xi32>
      %19 = arith.cmpi slt, %13, %18 : vector<16x128xi32>
      %20 = math.absf %16 : vector<16x128xf32>
      %cst = arith.constant 0.000000e+00 : f32
      %21 = vector.broadcast %cst : f32 to vector<16x128xf32>
      %22 = arith.select %19, %20, %21 : vector<16x128xi1>, vector<16x128xf32>
      %23 = vector.shape_cast %22 : vector<16x128xf32> to vector<2x8x128xf32>
      %cst_10 = arith.constant dense<0.000000e+00> : vector<8x128xf32>
      %24 = vector.multi_reduction <add>, %23, %cst_10 [0] : vector<2x8x128xf32> to vector<8x128xf32>
      %25 = arith.addf %17, %24 : vector<8x128xf32>
      %c0_11 = arith.constant 0 : index
      %c0_12 = arith.constant 0 : index
      %26 = vector.load %arg6[%c0_11, %c0_12] : memref<8x128xf32, #tpu.memory_space<vmem>>, vector<8x128xf32>
      tpu.vector_store %arg6[%c0_11, %c0_12], %25 {strides = array<i32>} : memref<8x128xf32, #tpu.memory_space<vmem>>, vector<8x128xf32>,
    } else {
    }
    %c1_i32 = arith.constant 1 : i32
    %8 = arith.cmpi eq, %1, %c1_i32 : i32
    %9 = arith.extui %8 : i1 to i32
    %c0_i32_3 = arith.constant 0 : i32
    %10 = arith.cmpi ne, %9, %c0_i32_3 : i32
    scf.if %10 {
      %11 = tpu.iota {dimensions = array<i32: 0>} : vector<8x128xi32>
      %c0_i32_4 = arith.constant 0 : i32
      %12 = vector.broadcast %c0_i32_4 : i32 to vector<8x128xi32>
      %13 = arith.addi %12, %11 : vector<8x128xi32>
      %c0 = arith.constant 0 : index
      %c0_5 = arith.constant 0 : index
      %14 = vector.load %arg4[%c0, %c0_5] : memref<8x128xf32, #tpu.memory_space<vmem>>, vector<8x128xf32>
      %c0_6 = arith.constant 0 : index
      %c0_7 = arith.constant 0 : index
      %15 = vector.load %arg5[%c0_6, %c0_7] : memref<8x128xf32, #tpu.memory_space<vmem>>, vector<8x128xf32>
      %16 = arith.subf %14, %15 : vector<8x128xf32>
      %c0_8 = arith.constant 0 : index
      %c0_9 = arith.constant 0 : index
      %17 = vector.load %arg7[%c0_8, %c0_9] : memref<8x128xf32, #tpu.memory_space<vmem>>, vector<8x128xf32>
      %c4_i32 = arith.constant 4 : i32
      %18 = vector.broadcast %c4_i32 : i32 to vector<8x128xi32>
      %19 = arith.cmpi slt, %13, %18 : vector<8x128xi32>
      %20 = math.absf %16 : vector<8x128xf32>
      %cst = arith.constant 0.000000e+00 : f32
      %21 = vector.broadcast %cst : f32 to vector<8x128xf32>
      %22 = arith.select %19, %20, %21 : vector<8x128xi1>, vector<8x128xf32>
      %23 = vector.shape_cast %22 : vector<8x128xf32> to vector<1x8x128xf32>
      %cst_10 = arith.constant dense<0.000000e+00> : vector<8x128xf32>
      %24 = vector.multi_reduction <add>, %23, %cst_10 [0] : vector<1x8x128xf32> to vector<8x128xf32>
      %25 = arith.addf %17, %24 : vector<8x128xf32>
      %c0_11 = arith.constant 0 : index
      %c0_12 = arith.constant 0 : index
      %26 = vector.load %arg7[%c0_11, %c0_12] : memref<8x128xf32, #tpu.memory_space<vmem>>, vector<8x128xf32>
      tpu.vector_store %arg7[%c0_11, %c0_12], %25 {strides = array<i32>} : memref<8x128xf32, #tpu.memory_space<vmem>>, vector<8x128xf32>,
    } else {
    }
    return
  }
  func.func @transform_0(%arg0: i32, %arg1: i32) -> (i32, i32) {
    %c2_i32 = arith.constant 2 : i32
    %0 = arith.muli %arg0, %c2_i32 : i32
    %1 = arith.addi %0, %arg1 : i32
    %c0_i32 = arith.constant 0 : i32
    %2 = arith.minsi %1, %c0_i32 : i32
    %c0_i32_0 = arith.constant 0 : i32
    %c0_i32_1 = arith.constant 0 : i32
    return %2, %c0_i32_0 : i32, i32
  }
  func.func @transform_1(%arg0: i32, %arg1: i32) -> (i32, i32) {
    %c2_i32 = arith.constant 2 : i32
    %0 = arith.muli %arg0, %c2_i32 : i32
    %1 = arith.addi %0, %arg1 : i32
    %c0_i32 = arith.constant 0 : i32
    %2 = arith.minsi %1, %c0_i32 : i32
    %c0_i32_0 = arith.constant 0 : i32
    %c0_i32_1 = arith.constant 0 : i32
    return %2, %c0_i32_0 : i32, i32
  }
  func.func @transform_2(%arg0: i32, %arg1: i32) -> (i32, i32) {
    %c2_i32 = arith.constant 2 : i32
    %0 = arith.muli %arg0, %c2_i32 : i32
    %1 = arith.addi %0, %arg1 : i32
    %c1_i32 = arith.constant 1 : i32
    %2 = arith.subi %1, %c1_i32 : i32
    %c0_i32 = arith.constant 0 : i32
    %3 = arith.maxsi %2, %c0_i32 : i32
    %c0_i32_0 = arith.constant 0 : i32
    %4 = arith.minsi %3, %c0_i32_0 : i32
    %c0_i32_1 = arith.constant 0 : i32
    %c0_i32_2 = arith.constant 0 : i32
    return %4, %c0_i32_1 : i32, i32
  }
  func.func @transform_3(%arg0: i32, %arg1: i32) -> (i32, i32) {
    %c2_i32 = arith.constant 2 : i32
    %0 = arith.muli %arg0, %c2_i32 : i32
    %1 = arith.addi %0, %arg1 : i32
    %c1_i32 = arith.constant 1 : i32
    %2 = arith.subi %1, %c1_i32 : i32
    %c0_i32 = arith.constant 0 : i32
    %3 = arith.maxsi %2, %c0_i32 : i32
    %c0_i32_0 = arith.constant 0 : i32
    %4 = arith.minsi %3, %c0_i32_0 : i32
    %c0_i32_1 = arith.constant 0 : i32
    %c0_i32_2 = arith.constant 0 : i32
    return %4, %c0_i32_1 : i32, i32
  }
  func.func @transform_4(%arg0: i32, %arg1: i32) -> (i32, i32) {
    %c0_i32 = arith.constant 0 : i32
    %c0_i32_0 = arith.constant 0 : i32
    return %arg0, %c0_i32 : i32, i32
  }
  func.func @transform_5(%arg0: i32, %arg1: i32) -> (i32, i32) {
    %c0_i32 = arith.constant 0 : i32
    %c0_i32_0 = arith.constant 0 : i32
    return %arg0, %c0_i32 : i32, i32
  }
}

</mosaic_0001>

<llo_original>
// kernel: tpu_custom_call.1
$region0: #{tpu_custom_call.1}
  #allocation0 [shape = 'u32[]', space=smem, size = 0x4, offset = 0x4, fixed_abs, tag = 'smem constant byte address 0x4 - core index']
  #allocation1 [shape = 'u32[72,128]{1,0:T(1,128)}', space=vmem, size = 0x9000, scoped, tag = 'internal scratch']
  %s0 = inlined_call_operand.hbm [shape: f32[12,128], index: 0, kind: input, shape index: {}]
  %s1 = inlined_call_operand.hbm [shape: f32[12,128], index: 1, kind: input, shape index: {}]
  %s2 = inlined_call_operand.hbm [shape: f32[4,128], index: 2, kind: input, shape index: {}]
  %s3 = inlined_call_operand.hbm [shape: f32[4,128], index: 3, kind: input, shape index: {}]
  %s4 = inlined_call_operand.hbm [shape: f32[8,128], index: 4, kind: output, shape index: {0}]
  %s5 = inlined_call_operand.hbm [shape: f32[8,128], index: 5, kind: output, shape index: {1}]
  %6 = xla_tuple %s4, %s5
  %s7 = sld [smem:[#allocation0]]
  $region85: #{tpu_custom_call.1} parent=0
    _
  %s9 = ssub.s32 1, %s7
  %s10 = scalar_select 0, %s9, %s7
  $region1: #{tpu_custom_call.1} parent=0
    #allocation2 [shape = 'u8[16384]{0}', space=vmem, size = 0x4000, scoped, tag = 'input window, operand 0']
    #allocation3 [shape = 's32[2]{0}', space=sflag, size = 0x8, scoped, tag = 'scoped memory for tpu_custom_call.1']
    #allocation4 [shape = 's32[2]{0}', space=sflag, size = 0x8, scoped, tag = 'scoped memory for tpu_custom_call.1']
    #allocation5 [shape = 'u8[16384]{0}', space=vmem, size = 0x4000, scoped, tag = 'input window, operand 1']
    #allocation6 [shape = 's32[2]{0}', space=sflag, size = 0x8, scoped, tag = 'scoped memory for tpu_custom_call.1']
    #allocation7 [shape = 'u8[8192]{0}', space=vmem, size = 0x2000, scoped, tag = 'input window, operand 2']
    #allocation8 [shape = 'u8[8192]{0}', space=vmem, size = 0x2000, scoped, tag = 'input window, operand 3']
    #allocation9 [shape = 's32[2]{0}', space=sflag, size = 0x8, scoped, tag = 'scoped memory for tpu_custom_call.1']
    #allocation10 [shape = 'u8[4096]{0}', space=vmem, size = 0x1000, scoped, tag = 'output window, operand 0, single buffered']
    #allocation11 [shape = 'u8[4096]{0}', space=vmem, size = 0x1000, scoped, tag = 'output window, operand 1, single buffered']
    #allocation12 [shape = 's32[1]{0}', space=sflag, size = 0x4, scoped, tag = 'scoped memory for tpu_custom_call.1']
    %11 = vsyncpa [#allocation3], 0
    %s12 = scalar_lea.sflag [#allocation3], 1
    %13 = vsyncpa %s12, 0
    %14 = vsyncpa [#allocation6], 0
    %s15 = scalar_lea.sflag [#allocation6], 1
    %16 = vsyncpa %s15, 0
    %17 = vsyncpa [#allocation9], 0
    %s18 = scalar_lea.sflag [#allocation9], 1
    %19 = vsyncpa %s18, 0
    %20 = vsyncpa [#allocation4], 0
    %21 = vsyncpa [#allocation12], 0
    loop: start=0, step=1, limit=4
    $region2: #{tpu_custom_call.1} parent=1 // loop_pre_header
      _
    $region3: #{tpu_custom_call.1} parent=1 // loop_header
      %s23 = sphi 0, %s27
      %p24 = scmp.ge.s32.totalorder %s23, 4
      %s30 = sphi 0, %s42
      %s31 = sphi 0, %s38
      %s32 = sphi 0, %s30
      %s33 = sphi 0, %s31
      %s34 = sphi 0, %s32
      %s35 = sphi 0, %s33
      %s53 = sphi 0, %s55
      %s56 = sphi 0, %s53
      %s57 = sphi 0, %s56
      %s73 = sphi 0, %s57
      %s87 = sphi 0, %s89
      %s90 = sphi 0, %s87
      %s91 = sphi 0, %s90
      %s107 = sphi 0, %s91
      %s127 = sphi 0, %s129
      %s130 = sphi 0, %s127
      %s131 = sphi 0, %s130
      %s147 = sphi 0, %s131
      %s167 = sphi 0, %s169
      %s170 = sphi 0, %s167
      %s171 = sphi 0, %s170
      %s187 = sphi 0, %s171
      %s193 = sphi 0, %s195
      %s196 = sphi 0, %s193
      %s197 = sphi 0, %s196
      %s213 = sphi 0, %s197
      %s219 = sphi 0, %s221
      %s222 = sphi 0, %s219
      %s223 = sphi 0, %s222
      %s239 = sphi 0, %s223
    $region4: #{tpu_custom_call.1} parent=1 // loop_header_branch
      %26 = sbr.rel (%p24) target = $region8
    $region5: #{tpu_custom_call.1} parent=1 // loop_body
      %s28 = ssub.s32 %s23, 1
      %s29 = ssub.s32 %s23, 2
      %s36 = sadd.s32 1, %s31
      %p37 = scmp.ge.s32.totalorder %s36, 2
      %s38 = scalar_select %p37, 0, %s36
      %s39 = sadd.s32 1, %s30
      %s40 = scalar_select %p37, %s39, %s30
      %p41 = scmp.ge.s32.totalorder %s40, 1
      %s42 = scalar_select %p41, 0, %s40
      %s43 = smul.u32 %s30, 2
      %s44 = sadd.s32 %s43, %s31
      %p45 = scmp.lt.s32.totalorder %s44, 0
      %s46 = scalar_select %p45, %s44, 0
      %s47 = smul.u32 %s42, 2
      %s48 = sadd.s32 %s47, %s38
      %p49 = scmp.lt.s32.totalorder %s48, 0
      %s50 = scalar_select %p49, %s48, 0
      %s51 = ssub.s32 %s46, %s50
      %p52 = scmp.eq.s32.totalorder %s51, 0
      %s54 = sadd.s32 %s53, 1
      %s55 = scalar_select %p52, %s53, %s54
      %p58 = pneg %p52
      %p59 = scmp.eq.s32.totalorder %s23, 1
      %p60 = por %p58, %p59
      %p61 = scmp.ne.s32.totalorder %s53, %s56
      %p62 = scmp.eq.s32.totalorder %s23, 0
      %p63 = por %p61, %p62
      %p64 = scmp.ne.s32.totalorder %s53, %s56
      %p65 = scmp.eq.s32.totalorder %s28, 1
      %p66 = por %p64, %p65
      %p67 = scmp.ne.s32.totalorder %s56, %s57
      %p68 = scmp.eq.s32.totalorder %s28, 0
      %p69 = por %p67, %p68
      %p70 = scmp.ne.s32.totalorder %s56, %s57
      %p71 = scmp.eq.s32.totalorder %s29, 1
      %p72 = por %p70, %p71
      %p74 = scmp.ne.s32.totalorder %s57, %s73
      %p75 = scmp.eq.s32.totalorder %s29, 0
      %p76 = por %p74, %p75
      %s77 = smul.u32 %s30, 2
      %s78 = sadd.s32 %s77, %s31
      %p79 = scmp.lt.s32.totalorder %s78, 0
      %s80 = scalar_select %p79, %s78, 0
      %s81 = smul.u32 %s42, 2
      %s82 = sadd.s32 %s81, %s38
      %p83 = scmp.lt.s32.totalorder %s82, 0
      %s84 = scalar_select %p83, %s82, 0
      %s85 = ssub.s32 %s80, %s84
      %p86 = scmp.eq.s32.totalorder %s85, 0
      %s88 = sadd.s32 %s87, 1
      %s89 = scalar_select %p86, %s87, %s88
      %p92 = pneg %p86
      %p93 = scmp.eq.s32.totalorder %s23, 1
      %p94 = por %p92, %p93
      %p95 = scmp.ne.s32.totalorder %s87, %s90
      %p96 = scmp.eq.s32.totalorder %s23, 0
      %p97 = por %p95, %p96
      %p98 = scmp.ne.s32.totalorder %s87, %s90
      %p99 = scmp.eq.s32.totalorder %s28, 1
      %p100 = por %p98, %p99
      %p101 = scmp.ne.s32.totalorder %s90, %s91
      %p102 = scmp.eq.s32.totalorder %s28, 0
      %p103 = por %p101, %p102
      %p104 = scmp.ne.s32.totalorder %s90, %s91
      %p105 = scmp.eq.s32.totalorder %s29, 1
      %p106 = por %p104, %p105
      %p108 = scmp.ne.s32.totalorder %s91, %s107
      %p109 = scmp.eq.s32.totalorder %s29, 0
      %p110 = por %p108, %p109
      %s111 = smul.u32 %s30, 2
      %s112 = sadd.s32 %s111, %s31
      %s113 = ssub.s32 %s112, 1
      %p114 = scmp.gt.s32.totalorder %s113, 0
      %s115 = scalar_select %p114, %s113, 0
      %p116 = scmp.lt.s32.totalorder %s115, 0
      %s117 = scalar_select %p116, %s115, 0
      %s118 = smul.u32 %s42, 2
      %s119 = sadd.s32 %s118, %s38
      %s120 = ssub.s32 %s119, 1
      %p121 = scmp.gt.s32.totalorder %s120, 0
      %s122 = scalar_select %p121, %s120, 0
      %p123 = scmp.lt.s32.totalorder %s122, 0
      %s124 = scalar_select %p123, %s122, 0
      %s125 = ssub.s32 %s117, %s124
      %p126 = scmp.eq.s32.totalorder %s125, 0
      %s128 = sadd.s32 %s127, 1
      %s129 = scalar_select %p126, %s127, %s128
      %p132 = pneg %p126
      %p133 = scmp.eq.s32.totalorder %s23, 1
      %p134 = por %p132, %p133
      %p135 = scmp.ne.s32.totalorder %s127, %s130
      %p136 = scmp.eq.s32.totalorder %s23, 0
      %p137 = por %p135, %p136
      %p138 = scmp.ne.s32.totalorder %s127, %s130
      %p139 = scmp.eq.s32.totalorder %s28, 1
      %p140 = por %p138, %p139
      %p141 = scmp.ne.s32.totalorder %s130, %s131
      %p142 = scmp.eq.s32.totalorder %s28, 0
      %p143 = por %p141, %p142
      %p144 = scmp.ne.s32.totalorder %s130, %s131
      %p145 = scmp.eq.s32.totalorder %s29, 1
      %p146 = por %p144, %p145
      %p148 = scmp.ne.s32.totalorder %s131, %s147
      %p149 = scmp.eq.s32.totalorder %s29, 0
      %p150 = por %p148, %p149
      %s151 = smul.u32 %s30, 2
      %s152 = sadd.s32 %s151, %s31
      %s153 = ssub.s32 %s152, 1
      %p154 = scmp.gt.s32.totalorder %s153, 0
      %s155 = scalar_select %p154, %s153, 0
      %p156 = scmp.lt.s32.totalorder %s155, 0
      %s157 = scalar_select %p156, %s155, 0
      %s158 = smul.u32 %s42, 2
      %s159 = sadd.s32 %s158, %s38
      %s160 = ssub.s32 %s159, 1
      %p161 = scmp.gt.s32.totalorder %s160, 0
      %s162 = scalar_select %p161, %s160, 0
      %p163 = scmp.lt.s32.totalorder %s162, 0
      %s164 = scalar_select %p163, %s162, 0
      %s165 = ssub.s32 %s157, %s164
      %p166 = scmp.eq.s32.totalorder %s165, 0
      %s168 = sadd.s32 %s167, 1
      %s169 = scalar_select %p166, %s167, %s168
      %p172 = pneg %p166
      %p173 = scmp.eq.s32.totalorder %s23, 1
      %p174 = por %p172, %p173
      %p175 = scmp.ne.s32.totalorder %s167, %s170
      %p176 = scmp.eq.s32.totalorder %s23, 0
      %p177 = por %p175, %p176
      %p178 = scmp.ne.s32.totalorder %s167, %s170
      %p179 = scmp.eq.s32.totalorder %s28, 1
      %p180 = por %p178, %p179
      %p181 = scmp.ne.s32.totalorder %s170, %s171
      %p182 = scmp.eq.s32.totalorder %s28, 0
      %p183 = por %p181, %p182
      %p184 = scmp.ne.s32.totalorder %s170, %s171
      %p185 = scmp.eq.s32.totalorder %s29, 1
      %p186 = por %p184, %p185
      %p188 = scmp.ne.s32.totalorder %s171, %s187
      %p189 = scmp.eq.s32.totalorder %s29, 0
      %p190 = por %p188, %p189
      %s191 = ssub.s32 %s30, %s42
      %p192 = scmp.eq.s32.totalorder %s191, 0
      %s194 = sadd.s32 %s193, 1
      %s195 = scalar_select %p192, %s193, %s194
      %p198 = pneg %p192
      %p199 = scmp.eq.s32.totalorder %s23, 1
      %p200 = por %p198, %p199
      %p201 = scmp.ne.s32.totalorder %s193, %s196
      %p202 = scmp.eq.s32.totalorder %s23, 0
      %p203 = por %p201, %p202
      %p204 = scmp.ne.s32.totalorder %s193, %s196
      %p205 = scmp.eq.s32.totalorder %s28, 1
      %p206 = por %p204, %p205
      %p207 = scmp.ne.s32.totalorder %s196, %s197
      %p208 = scmp.eq.s32.totalorder %s28, 0
      %p209 = por %p207, %p208
      %p210 = scmp.ne.s32.totalorder %s196, %s197
      %p211 = scmp.eq.s32.totalorder %s29, 1
      %p212 = por %p210, %p211
      %p214 = scmp.ne.s32.totalorder %s197, %s213
      %p215 = scmp.eq.s32.totalorder %s29, 0
      %p216 = por %p214, %p215
      %s217 = ssub.s32 %s30, %s42
      %p218 = scmp.eq.s32.totalorder %s217, 0
      %s220 = sadd.s32 %s219, 1
      %s221 = scalar_select %p218, %s219, %s220
      %p224 = pneg %p218
      %p225 = scmp.eq.s32.totalorder %s23, 1
      %p226 = por %p224, %p225
      %p227 = scmp.ne.s32.totalorder %s219, %s222
      %p228 = scmp.eq.s32.totalorder %s23, 0
      %p229 = por %p227, %p228
      %p230 = scmp.ne.s32.totalorder %s219, %s222
      %p231 = scmp.eq.s32.totalorder %s28, 1
      %p232 = por %p230, %p231
      %p233 = scmp.ne.s32.totalorder %s222, %s223
      %p234 = scmp.eq.s32.totalorder %s28, 0
      %p235 = por %p233, %p234
      %p236 = scmp.ne.s32.totalorder %s222, %s223
      %p237 = scmp.eq.s32.totalorder %s29, 1
      %p238 = por %p236, %p237
      %p240 = scmp.ne.s32.totalorder %s223, %s239
      %p241 = scmp.eq.s32.totalorder %s29, 0
      %p242 = por %p240, %p241
      %p243 = scmp.le.s32.totalorder 1, %s23
      %p244 = scmp.lt.s32.totalorder %s23, 3
      %p245 = pnand %p243, %p244
      %p246 = pneg %p245
      // Predicated region
      $region9: #{tpu_custom_call.1} parent=5 // pred_check
        _
      $region10: #{tpu_custom_call.1} parent=5 // pred_check_branch
        %248 = sbr.rel (%p245) target = $region12
      $region11: #{tpu_custom_call.1} parent=5 // pred_region
        %s249 = ssub.s32 %s23, 1
      $region12: #{tpu_custom_call.1} parent=5 // pred_fallthru
        _
      %p250 = scmp.lt.s32.totalorder %s23, 2
      // Predicated region
      $region13: #{tpu_custom_call.1} parent=5 // pred_check
        %p251 = pneg %p250
      $region14: #{tpu_custom_call.1} parent=5 // pred_check_branch
        %253 = sbr.rel (%p251) target = $region16
      $region15: #{tpu_custom_call.1} parent=5 // pred_region
        // Predicated region
        $region17: #{tpu_custom_call.1} parent=15 // pred_check
          %p254 = pneg %p63
        $region18: #{tpu_custom_call.1} parent=15 // pred_check_branch
          %256 = sbr.rel (%p254) target = $region20
        $region19: #{tpu_custom_call.1} parent=15 // pred_region
          %s257 = sand.u32 %s53, 1
          %s258 = scalar_lea.sflag [#allocation3], %s257
          %s259 = sand.u32 %s53, 1
          %s260 = smul.addr %s259, 16
          %s261 = scalar_lea.vmem [#allocation2], %s260
          %s262 = smul.u32 %s30, 2
          %s263 = sadd.s32 %s262, %s31
          %p264 = scmp.lt.s32.totalorder %s263, 0
          %s265 = scalar_select %p264, %s263, 0
          %s266 = smul.u32 2, %s265
          %268 = vsyncadd %s258, 0
          %s269 = smul.addr %s266, 8
          %s270 = scalar_lea.hbm %s0, %s269
          %s271 = sshll.u32 %s270, 4
          %s272 = int_to_ptr.hbm [resolvable:$true] %s271
          %s273 = sshll.u32 %s261, 4
          %s274 = int_to_ptr.vmem [resolvable:$true] %s273
          %279 = dma.hbm_to_vmem [thread:$0]  %s272, 256, %s274, %s258, 128, 128, 8
        $region20: #{tpu_custom_call.1} parent=15 // pred_fallthru
          _
        // Predicated region
        $region21: #{tpu_custom_call.1} parent=15 // pred_check
          %p280 = pneg %p97
        $region22: #{tpu_custom_call.1} parent=15 // pred_check_branch
          %282 = sbr.rel (%p280) target = $region24
        $region23: #{tpu_custom_call.1} parent=15 // pred_region
          %s283 = sand.u32 %s23, 1
          %s284 = scalar_lea.sflag [#allocation6], %s283
          %s285 = sand.u32 %s87, 1
          %s286 = smul.addr %s285, 16
          %s287 = scalar_lea.vmem [#allocation5], %s286
          %s288 = smul.u32 %s30, 2
          %s289 = sadd.s32 %s288, %s31
          %p290 = scmp.lt.s32.totalorder %s289, 0
          %s291 = scalar_select %p290, %s289, 0
          %s292 = smul.u32 2, %s291
          %294 = vsyncadd %s284, 0
          %s295 = smul.addr %s292, 8
          %s296 = scalar_lea.hbm %s1, %s295
          %s297 = sshll.u32 %s296, 4
          %s298 = int_to_ptr.hbm [resolvable:$true] %s297
          %s299 = sshll.u32 %s287, 4
          %s300 = int_to_ptr.vmem [resolvable:$true] %s299
          %305 = dma.hbm_to_vmem [thread:$0]  %s298, 256, %s300, %s284, 128, 128, 8
        $region24: #{tpu_custom_call.1} parent=15 // pred_fallthru
          _
        // Predicated region
        $region25: #{tpu_custom_call.1} parent=15 // pred_check
          %p306 = pneg %p137
        $region26: #{tpu_custom_call.1} parent=15 // pred_check_branch
          %308 = sbr.rel (%p306) target = $region28
        $region27: #{tpu_custom_call.1} parent=15 // pred_region
          %s309 = sand.u32 %s23, 1
          %s310 = scalar_lea.sflag [#allocation6], %s309
          %s311 = sand.u32 %s127, 1
          %s312 = smul.addr %s311, 8
          %s313 = scalar_lea.vmem [#allocation7], %s312
          %s314 = smul.u32 %s30, 2
          %s315 = sadd.s32 %s314, %s31
          %s316 = ssub.s32 %s315, 1
          %p317 = scmp.gt.s32.totalorder %s316, 0
          %s318 = scalar_select %p317, %s316, 0
          %p319 = scmp.lt.s32.totalorder %s318, 0
          %s320 = scalar_select %p319, %s318, 0
          %s321 = smul.u32 2, %s320
          %s322 = ssub.s32 1, %s321
          %s323 = smul.u32 4, %s322
          %s324 = ssub.s32 8, %s323
          %s325 = sshll.u32 %s324, 4
          %326 = vsyncadd %s310, %s325
          %p327 = scmp.ne.s32.totalorder 0, %s323
          %s328 = smul.addr %s321, 4
          %s329 = scalar_lea.hbm %s2, %s328
          %s330 = smul.u32 4, %s322
          %s331 = sshll.u32 %s329, 4
          %s332 = int_to_ptr.hbm [resolvable:$true] %s331
          %s333 = sshll.u32 %s313, 4
          %s334 = int_to_ptr.vmem [resolvable:$true] %s333
          %s335 = sshll.u32 %s330, 4
          %339 = dma.hbm_to_vmem [thread:$0]  (%p327), %s332, %s335, %s334, %s310, 64, 64, 4
        $region28: #{tpu_custom_call.1} parent=15 // pred_fallthru
          _
        // Predicated region
        $region29: #{tpu_custom_call.1} parent=15 // pred_check
          %p340 = pneg %p177
        $region30: #{tpu_custom_call.1} parent=15 // pred_check_branch
          %342 = sbr.rel (%p340) target = $region32
        $region31: #{tpu_custom_call.1} parent=15 // pred_region
          %s343 = sand.u32 %s167, 1
          %s344 = scalar_lea.sflag [#allocation9], %s343
          %s345 = sand.u32 %s167, 1
          %s346 = smul.addr %s345, 8
          %s347 = scalar_lea.vmem [#allocation8], %s346
          %s348 = smul.u32 %s30, 2
          %s349 = sadd.s32 %s348, %s31
          %s350 = ssub.s32 %s349, 1
          %p351 = scmp.gt.s32.totalorder %s350, 0
          %s352 = scalar_select %p351, %s350, 0
          %p353 = scmp.lt.s32.totalorder %s352, 0
          %s354 = scalar_select %p353, %s352, 0
          %s355 = smul.u32 2, %s354
          %s356 = ssub.s32 1, %s355
          %s357 = smul.u32 4, %s356
          %s358 = ssub.s32 8, %s357
          %s359 = sshll.u32 %s358, 4
          %360 = vsyncadd %s344, %s359
          %p361 = scmp.ne.s32.totalorder 0, %s357
          %s362 = smul.addr %s355, 4
          %s363 = scalar_lea.hbm %s3, %s362
          %s364 = smul.u32 4, %s356
          %s365 = sshll.u32 %s363, 4
          %s366 = int_to_ptr.hbm [resolvable:$true] %s365
          %s367 = sshll.u32 %s347, 4
          %s368 = int_to_ptr.vmem [resolvable:$true] %s367
          %s369 = sshll.u32 %s364, 4
          %373 = dma.hbm_to_vmem [thread:$0]  (%p361), %s366, %s369, %s368, %s344, 64, 64, 4
        $region32: #{tpu_custom_call.1} parent=15 // pred_fallthru
          _
      $region16: #{tpu_custom_call.1} parent=5 // pred_fallthru
        _
      %p374 = scmp.le.s32.totalorder 1, %s23
      %p375 = scmp.lt.s32.totalorder %s23, 3
      %p376 = pnand %p374, %p375
      %p377 = pneg %p376
      // Predicated region
      $region33: #{tpu_custom_call.1} parent=5 // pred_check
        _
      $region34: #{tpu_custom_call.1} parent=5 // pred_check_branch
        %379 = sbr.rel (%p376) target = $region36
      $region35: #{tpu_custom_call.1} parent=5 // pred_region
        %s380 = ssub.s32 %s23, 1
        %s381 = sand.u32 %s56, 1
        %s382 = scalar_lea.sflag [#allocation3], %s381
        %s383 = sand.u32 %s56, 1
        %s384 = smul.addr %s383, 16
        %s385 = scalar_lea.vmem [#allocation2], %s384
        // Predicated region
        $region37: #{tpu_custom_call.1} parent=35 // pred_check
          %p386 = pneg %p69
        $region38: #{tpu_custom_call.1} parent=35 // pred_check_branch
          %388 = sbr.rel (%p386) target = $region40
        $region39: #{tpu_custom_call.1} parent=35 // pred_region
          %390 = dma.done %s382, 256
        $region40: #{tpu_custom_call.1} parent=35 // pred_fallthru
          _
        %s391 = sand.u32 %s28, 1
        %s392 = scalar_lea.sflag [#allocation6], %s391
        %s393 = sand.u32 %s90, 1
        %s394 = smul.addr %s393, 16
        %s395 = scalar_lea.vmem [#allocation5], %s394
        // Predicated region
        $region41: #{tpu_custom_call.1} parent=35 // pred_check
          %p396 = pneg %p103
        $region42: #{tpu_custom_call.1} parent=35 // pred_check_branch
          %398 = sbr.rel (%p396) target = $region44
        $region43: #{tpu_custom_call.1} parent=35 // pred_region
          %400 = dma.done %s392, 256
        $region44: #{tpu_custom_call.1} parent=35 // pred_fallthru
          _
        %s401 = sand.u32 %s28, 1
        %s402 = scalar_lea.sflag [#allocation6], %s401
        %s403 = sand.u32 %s130, 1
        %s404 = smul.addr %s403, 8
        %s405 = scalar_lea.vmem [#allocation7], %s404
        // Predicated region
        $region45: #{tpu_custom_call.1} parent=35 // pred_check
          %p406 = pneg %p143
        $region46: #{tpu_custom_call.1} parent=35 // pred_check_branch
          %408 = sbr.rel (%p406) target = $region48
        $region47: #{tpu_custom_call.1} parent=35 // pred_region
          %410 = dma.done %s402, 128
        $region48: #{tpu_custom_call.1} parent=35 // pred_fallthru
          _
        %s411 = sand.u32 %s170, 1
        %s412 = scalar_lea.sflag [#allocation9], %s411
        %s413 = sand.u32 %s170, 1
        %s414 = smul.addr %s413, 8
        %s415 = scalar_lea.vmem [#allocation8], %s414
        // Predicated region
        $region49: #{tpu_custom_call.1} parent=35 // pred_check
          %p416 = pneg %p183
        $region50: #{tpu_custom_call.1} parent=35 // pred_check_branch
          %418 = sbr.rel (%p416) target = $region52
        $region51: #{tpu_custom_call.1} parent=35 // pred_region
          %420 = dma.done %s412, 128
        $region52: #{tpu_custom_call.1} parent=35 // pred_fallthru
          _
        %s421 = sand.u32 %s56, 1
        %s422 = scalar_lea.sflag [#allocation3], %s421
        %s423 = sand.u32 %s56, 1
        %s424 = smul.addr %s423, 16
        %s425 = scalar_lea.vmem [#allocation2], %s424
        %p426 = pneg %p69
        %p427 = pneg %p66
        %s428 = sand.u32 %s28, 1
        %s429 = scalar_lea.sflag [#allocation6], %s428
        %s430 = sand.u32 %s90, 1
        %s431 = smul.addr %s430, 16
        %s432 = scalar_lea.vmem [#allocation5], %s431
        %p433 = pneg %p103
        %p434 = pneg %p100
        %s435 = sand.u32 %s28, 1
        %s436 = scalar_lea.sflag [#allocation6], %s435
        %s437 = sand.u32 %s130, 1
        %s438 = smul.addr %s437, 8
        %s439 = scalar_lea.vmem [#allocation7], %s438
        %p440 = pneg %p143
        %p441 = pneg %p140
        %s442 = sand.u32 %s170, 1
        %s443 = scalar_lea.sflag [#allocation9], %s442
        %s444 = sand.u32 %s170, 1
        %s445 = smul.addr %s444, 8
        %s446 = scalar_lea.vmem [#allocation8], %s445
        %p447 = pneg %p183
        %p448 = pneg %p180
        %p449 = pneg %p209
        %p450 = pneg %p206
        %p451 = pneg %p235
        %p452 = pneg %p232
        %s453 = smul.u32 %s32, 2
        %s454 = sadd.s32 %s453, %s33
        %p455 = scmp.lt.s32.totalorder %s454, 0
        %s456 = scalar_select %p455, %s454, 0
        %s457 = smul.u32 2, %s456
        %s458 = smul.u32 %s32, 2
        %s459 = sadd.s32 %s458, %s33
        %p460 = scmp.lt.s32.totalorder %s459, 0
        %s461 = scalar_select %p460, %s459, 0
        %s462 = smul.u32 2, %s461
        %s463 = smul.u32 %s32, 2
        %s464 = sadd.s32 %s463, %s33
        %s465 = ssub.s32 %s464, 1
        %p466 = scmp.gt.s32.totalorder %s465, 0
        %s467 = scalar_select %p466, %s465, 0
        %p468 = scmp.lt.s32.totalorder %s467, 0
        %s469 = scalar_select %p468, %s467, 0
        %s470 = smul.u32 2, %s469
        %s471 = ssub.s32 1, %s470
        %s472 = smul.u32 4, %s471
        %s473 = smul.u32 %s32, 2
        %s474 = sadd.s32 %s473, %s33
        %s475 = ssub.s32 %s474, 1
        %p476 = scmp.gt.s32.totalorder %s475, 0
        %s477 = scalar_select %p476, %s475, 0
        %p478 = scmp.lt.s32.totalorder %s477, 0
        %s479 = scalar_select %p478, %s477, 0
        %s480 = smul.u32 2, %s479
        %s481 = ssub.s32 1, %s480
        %s482 = smul.u32 4, %s481
        %s483 = smul.u32 %s32, 2
        %s484 = sadd.s32 %s483, %s33
        %p485 = scmp.eq.s32.totalorder %s33, 0
        // Predicated region
        $region53: #{tpu_custom_call.1} parent=35 // pred_check
          %p486 = pneg %p485
        $region54: #{tpu_custom_call.1} parent=35 // pred_check_branch
          %488 = sbr.rel (%p486) target = $region56
        $region55: #{tpu_custom_call.1} parent=35 // pred_region
          %489 = vst [vmem:[#allocation10] sm:$0xff] 0.0
          %490 = vst [vmem:[#allocation11] sm:$0xff] 0.0
        $region56: #{tpu_custom_call.1} parent=35 // pred_fallthru
          _
        %p491 = scmp.eq.s32.totalorder %s484, 0
        // Predicated region
        $region57: #{tpu_custom_call.1} parent=35 // pred_check
          %p492 = pneg %p491
        $region58: #{tpu_custom_call.1} parent=35 // pred_check_branch
          %494 = sbr.rel (%p492) target = $region60
        $region59: #{tpu_custom_call.1} parent=35 // pred_region
          %v495 = vlaneseq
          %v496 = vshrl.u32 %v495, 7
          %v497 = vadd.s32 %v496, 8
          %v498 = vld [vmem:[%s385] sm:$0xff]
          %v499 = vld [vmem:[%s385 + $0x8] sm:$0xff]
          %v500 = vld [vmem:[%s395] sm:$0xff]
          %v501 = vld [vmem:[%s395 + $0x8] sm:$0xff]
          %v502 = vsub.f32 %v498, %v500
          %v503 = vsub.f32 %v499, %v501
          %v504 = vld [vmem:[#allocation10] sm:$0xff]
          %vm505 = vcmp.lt.s32.totalorder %v496, 12
          %vm506 = vcmp.lt.s32.totalorder %v497, 12
          %v507 = vand.u32 2147483647, %v502
          %v508 = vand.u32 2147483647, %v503
          %v509 = vsel %vm505, %v507, 0.0
          %v510 = vsel %vm506, %v508, 0.0
          %v511 = vadd.f32 %v509, %v510
          %v512 = vadd.f32 %v504, %v511
          %513 = vst [vmem:[#allocation10] sm:$0xff] %v512
        $region60: #{tpu_custom_call.1} parent=35 // pred_fallthru
          _
        %p514 = scmp.eq.s32.totalorder %s484, 1
        // Predicated region
        $region61: #{tpu_custom_call.1} parent=35 // pred_check
          %p515 = pneg %p514
        $region62: #{tpu_custom_call.1} parent=35 // pred_check_branch
          %517 = sbr.rel (%p515) target = $region64
        $region63: #{tpu_custom_call.1} parent=35 // pred_region
          %v518 = vlaneseq
          %v519 = vshrl.u32 %v518, 7
          %v520 = vld [vmem:[%s405] sm:$0xff]
          %v521 = vld [vmem:[%s415] sm:$0xff]
          %v522 = vsub.f32 %v520, %v521
          %v523 = vld [vmem:[#allocation11] sm:$0xff]
          %vm524 = vcmp.lt.s32.totalorder %v519, 4
          %v525 = vand.u32 2147483647, %v522
          %v526 = vsel %vm524, %v525, 0.0
          %v527 = vadd.f32 %v526, 0.0
          %v528 = vadd.f32 %v523, %v527
          %529 = vst [vmem:[#allocation11] sm:$0xff] %v528
        $region64: #{tpu_custom_call.1} parent=35 // pred_fallthru
          _
        // Predicated region
        $region65: #{tpu_custom_call.1} parent=35 // pred_check
          %p530 = pneg %p206
        $region66: #{tpu_custom_call.1} parent=35 // pred_check_branch
          %532 = sbr.rel (%p530) target = $region68
        $region67: #{tpu_custom_call.1} parent=35 // pred_region
          %534 = vsyncadd [#allocation4], 0
          %s535 = smul.addr %s32, 8
          %s536 = scalar_lea.hbm %s4, %s535
          %s538 = sshll.u32 [#allocation10], 4
          %s539 = int_to_ptr.vmem [resolvable:$true] %s538
          %s540 = sshll.u32 %s536, 4
          %s541 = int_to_ptr.hbm [resolvable:$true] %s540
          %543 = dma.vmem_to_hbm [thread:$0]  %s539, 128, %s541, [#allocation4]
        $region68: #{tpu_custom_call.1} parent=35 // pred_fallthru
          _
        // Predicated region
        $region69: #{tpu_custom_call.1} parent=35 // pred_check
          %p544 = pneg %p232
        $region70: #{tpu_custom_call.1} parent=35 // pred_check_branch
          %546 = sbr.rel (%p544) target = $region72
        $region71: #{tpu_custom_call.1} parent=35 // pred_region
          %548 = vsyncadd [#allocation12], 0
          %s549 = smul.addr %s32, 8
          %s550 = scalar_lea.hbm %s5, %s549
          %s552 = sshll.u32 [#allocation11], 4
          %s553 = int_to_ptr.vmem [resolvable:$true] %s552
          %s554 = sshll.u32 %s550, 4
          %s555 = int_to_ptr.hbm [resolvable:$true] %s554
          %557 = dma.vmem_to_hbm [thread:$0]  %s553, 128, %s555, [#allocation12]
        $region72: #{tpu_custom_call.1} parent=35 // pred_fallthru
          _
        // Predicated region
        $region73: #{tpu_custom_call.1} parent=35 // pred_check
          %p558 = pneg %p206
        $region74: #{tpu_custom_call.1} parent=35 // pred_check_branch
          %560 = sbr.rel (%p558) target = $region76
        $region75: #{tpu_custom_call.1} parent=35 // pred_region
          %562 = dma.done [#allocation4], 128
        $region76: #{tpu_custom_call.1} parent=35 // pred_fallthru
          _
        // Predicated region
        $region77: #{tpu_custom_call.1} parent=35 // pred_check
          %p563 = pneg %p232
        $region78: #{tpu_custom_call.1} parent=35 // pred_check_branch
          %565 = sbr.rel (%p563) target = $region80
        $region79: #{tpu_custom_call.1} parent=35 // pred_region
          %567 = dma.done [#allocation12], 128
        $region80: #{tpu_custom_call.1} parent=35 // pred_fallthru
          _
      $region36: #{tpu_custom_call.1} parent=5 // pred_fallthru
        _
      %p568 = scmp.le.s32.totalorder 2, %s23
      // Predicated region
      $region81: #{tpu_custom_call.1} parent=5 // pred_check
        %p569 = pneg %p568
      $region82: #{tpu_custom_call.1} parent=5 // pred_check_branch
        %571 = sbr.rel (%p569) target = $region84
      $region83: #{tpu_custom_call.1} parent=5 // pred_region
        %s572 = ssub.s32 %s23, 2
      $region84: #{tpu_custom_call.1} parent=5 // pred_fallthru
        _
    $region6: #{tpu_custom_call.1} parent=1 // loop_footer
      %s27 = sadd.s32 1, %s23
    $region7: #{tpu_custom_call.1} parent=1 // loop_footer_branch
      %22 = sbr.rel target = $region3
    $region8: #{tpu_custom_call.1} parent=1 // loop_exit
      _
    %573 = vsyncpa [#allocation3], 1
    %s574 = scalar_lea.sflag [#allocation3], 1
    %575 = vsyncpa %s574, 1
    %576 = vsyncpa [#allocation6], 1
    %s577 = scalar_lea.sflag [#allocation6], 1
    %578 = vsyncpa %s577, 1
    %579 = vsyncpa [#allocation9], 1
    %s580 = scalar_lea.sflag [#allocation9], 1
    %581 = vsyncpa %s580, 1
    %582 = vsyncpa [#allocation4], 1
    %s583 = scalar_lea.sflag [#allocation4], 1
    %584 = vsyncpa %s583, 1
    %585 = vsyncpa [#allocation12], 1

</llo_original>
